<compile_context>
chip_gen: v5e
topology: v5e:2x2
jax: 0.10.0
libtpu: 0.0.40
codegen_flags: <defaults>
</compile_context>

<pallas_src>
import functools

import jax
import jax.numpy as jnp
from jax import lax
from jax.experimental import pallas as pl
from jax.experimental.pallas import tpu as pltpu

_MIB = 1024 * 1024


def _round_up(v, m):
    return (v + m - 1) // m * m


def _vmem_capacity_bytes():
    try:
        info = pltpu.get_tpu_info()
        cap = getattr(info, "vmem_capacity_bytes", None)
        if cap:
            return int(cap)
    except Exception:
        pass
    return 64 * _MIB  # conservative default (v7x per-TensorCore capacity)


def _compiler_params(est_bytes, cap, semantics=None):
    limit = int(min(0.78 * cap, max(1.5 * est_bytes, 32 * _MIB)))
    kwargs = dict(vmem_limit_bytes=limit)
    if semantics is not None:
        kwargs["dimension_semantics"] = semantics
    return pltpu.CompilerParams(**kwargs)


def _main_vmem_estimate(n_pad, d_pad, a_pad, tm, mm_bytes):
    # Resident (double-buffered) inputs.
    resident = 2 * (n_pad * d_pad * mm_bytes      # x in matmul dtype
                    + a_pad * d_pad * mm_bytes    # anchor centers
                    + n_pad * 128 * 4             # target row (lane padded)
                    + 2 * a_pad * 128 * 4)        # ta + anchor weights
    # Per-step blocked buffers (double-buffered).
    blocked = 2 * (tm * d_pad * 4 + 2 * tm * 128 * 4 + 8 * 128 * 4)
    # In-body temporaries.
    body = (tm * n_pad * (mm_bytes + 4)           # mask + compare/where temp
            + tm * d_pad * (16 + mm_bytes)        # centers_raw/centers/diff/csq + cast
            + a_pad * tm * 24                     # gram/d2/dist/neg/hinge
            + a_pad * d_pad * 8)
    return resident + blocked + body


# ---------------------------------------------------------------------------
# Prologue: anchor-row class centers and same-class counts (single invocation).
# ---------------------------------------------------------------------------
def _anchor_kernel(x_ref, ta_ref, trow_ref, ac_ref, cnt_ref, *, mm_dtype):
    ta = ta_ref[...]                          # (a_pad, 1)  i32 (sentinel -1 = pad)
    trow = trow_ref[...]                      # (1, n_pad)  i32
    cond = (ta == trow) & (trow >= 0)         # (a_pad, n_pad) bool
    one = jnp.ones((), mm_dtype)
    zero = jnp.zeros((), mm_dtype)
    same_a = jnp.where(cond, one, zero)       # mask built directly in matmul dtype
    counts = jnp.sum(jnp.where(cond, 1.0, 0.0), axis=1, keepdims=True)  # (a_pad, 1)
    ac = jnp.dot(same_a, x_ref[...], preferred_element_type=jnp.float32)
    ac = ac * (1.0 / jnp.maximum(counts, 1.0))
    ac_ref[...] = ac.astype(ac_ref.dtype)
    cnt_ref[...] = counts


# ---------------------------------------------------------------------------
# Main kernel: one row block of TM samples per grid step (parallel grid axis).
# ---------------------------------------------------------------------------
def _dcs_block_kernel(x_mm_ref, x_blk_ref, tcol_ref, trow_ref, trowb_ref,
                      ta_ref, ac_ref, wa_ref, out_ref, *,
                      margin1, margin2, ones_col, mm_dtype):
    tcol = tcol_ref[...]            # (TM, 1)     i32  targets of this row block
    trow = trow_ref[...]            # (1, n_pad)  i32  all targets
    trow_blk = trowb_ref[...]       # (1, TM)     i32  targets of this column block
    one = jnp.ones((), mm_dtype)
    zero = jnp.zeros((), mm_dtype)

    # Same-class mask for this row block, built directly in the matmul dtype.
    cond = (tcol == trow) & (trow >= 0)                         # (TM, n_pad) bool
    same = jnp.where(cond, one, zero)                           # (TM, n_pad)

    # Per-row class centers for this block: one MXU pass over all samples.
    centers_raw = jnp.dot(same, x_mm_ref[...],
                          preferred_element_type=jnp.float32)   # (TM, d_pad) f32
    if ones_col is not None:
        # Class counts folded into the matmul via the constant 'ones' column.
        cidx = lax.broadcasted_iota(jnp.int32, (1, centers_raw.shape[1]), 1)
        counts = jnp.sum(jnp.where(cidx == ones_col, centers_raw, 0.0),
                         axis=1, keepdims=True)                 # (TM, 1)
    else:
        counts = jnp.sum(jnp.where(cond, 1.0, 0.0), axis=1, keepdims=True)
    inv_counts = 1.0 / jnp.maximum(counts, 1.0)
    centers = centers_raw * inv_counts                          # (TM, d_pad) f32

    # dist_pc partial sum over the rows of this block.
    diff = x_blk_ref[...] - centers
    dist_pc = jnp.sqrt(jnp.sum(diff * diff, axis=1, keepdims=True))   # (TM, 1)
    row_valid = jnp.where(tcol >= 0, 1.0, 0.0)
    dist_pc = jnp.maximum(dist_pc - margin1, 0.0) * row_valid
    pc_partial = jnp.sum(dist_pc)

    # Anchor-vs-block-column hinge: ||c_a - c_j|| over the columns of this block.
    ac = ac_ref[...]                                            # (a_pad, d_pad)
    ac_f32 = ac.astype(jnp.float32)
    sq_a = jnp.sum(ac_f32 * ac_f32, axis=1, keepdims=True)      # (a_pad, 1)
    csq = centers * centers
    ones_lhs = jnp.ones((8, csq.shape[1]), jnp.float32)
    sq_rows = lax.dot_general(ones_lhs, csq, (((1,), (1,)), ((), ())),
                              preferred_element_type=jnp.float32)     # (8, TM)
    sq_row = sq_rows[0:1, :]                                          # (1, TM)
    gram = lax.dot_general(ac, centers.astype(mm_dtype),
                           (((1,), (1,)), ((), ())),
                           preferred_element_type=jnp.float32)        # (a_pad, TM)
    d2 = sq_a + sq_row - 2.0 * gram
    dist = jnp.sqrt(jnp.maximum(d2, 1e-12))

    # Negatives: valid columns of a different class (from the -1 sentinel).
    neg = jnp.where((ta_ref[...] != trow_blk) & (trow_blk >= 0), 1.0, 0.0)
    hinge = jnp.maximum(margin2 - dist, 0.0) * neg              # (a_pad, TM)
    row_sum = jnp.sum(hinge, axis=1, keepdims=True)             # (a_pad, 1)
    # wa already contains valid / (neg_count * num_anchors), so the per-block
    # contribution is additive across the parallel grid.
    an_partial = jnp.sum(row_sum * wa_ref[...])

    col = lax.broadcasted_iota(jnp.int32, (8, 128), 1)
    out_ref[...] = (jnp.where(col == 0, pc_partial, 0.0)
                    + jnp.where(col == 1, an_partial, 0.0))


# ---------------------------------------------------------------------------
# Wrapper
# ---------------------------------------------------------------------------
def dcs_loss(inputs, targets, k_size, margin1=0.0, margin2=0.7,
             matmul_dtype=jnp.bfloat16, block_rows=None):
    """Pallas implementation of DCSLoss.forward.

    Returns (loss, dist_pc.mean(), dist_an.mean()) as float32 scalars.
    The default bfloat16 matmul path uses the native-rate MXU with f32
    accumulation (~1e-3 relative deviation from the f32 path); pass
    matmul_dtype=jnp.float32 for bit-accurate-ish results.
    """
    n, d = inputs.shape
    num_anchors = (n + k_size - 1) // k_size
    mm_dtype = jnp.dtype(matmul_dtype)
    mm_bytes = mm_dtype.itemsize

    # Feature padding. If d is not already a multiple of 128 a free padding
    # lane exists: put a constant 1.0 there so the class counts ride the
    # centers matmul (no (TM, n) cross-lane reduction).
    d_pad = _round_up(max(d, 1), 128)
    ones_col = d if d_pad > d else None

    a_pad = _round_up(num_anchors, 8)
    cap = _vmem_capacity_bytes()

    # Row-block size: generation-aware default, shrunk if the estimate is big.
    n128 = _round_up(n, 128)
    if block_rows is not None:
        tm = min(max(128, _round_up(block_rows, 128)), n128)
        n_pad = _round_up(n128, tm)
        est = _main_vmem_estimate(n_pad, d_pad, a_pad, tm, mm_bytes)
    else:
        tm = min(512 if cap > 96 * _MIB else 256, n128)
        while True:
            n_pad = _round_up(n128, tm)
            est = _main_vmem_estimate(n_pad, d_pad, a_pad, tm, mm_bytes)
            if tm <= 128 or est <= int(0.55 * cap):
                break
            tm //= 2
    num_blocks = n_pad // tm

    # ---- host-side input prep (padding + sentinel targets) -----------------
    x = jnp.zeros((n_pad, d_pad), jnp.float32)
    x = x.at[:n, :d].set(inputs.astype(jnp.float32))
    if ones_col is not None:
        x = x.at[:n, ones_col].set(1.0)
    x_mm = x.astype(mm_dtype)

    t = targets.astype(jnp.int32)
    t_full = jnp.full((n_pad,), -1, jnp.int32).at[:n].set(t)   # -1 = padded row
    tcol = t_full.reshape(n_pad, 1)
    trow = t_full.reshape(1, n_pad)

    anchor_idx = jnp.arange(0, n, k_size, dtype=jnp.int32)     # static length
    ta = jnp.full((a_pad,), -1, jnp.int32).at[:num_anchors].set(t[anchor_idx])
    ta = ta.reshape(a_pad, 1)
    avalid = (jnp.arange(a_pad) < num_anchors).astype(jnp.float32).reshape(a_pad, 1)

    # ---- prologue: anchor centers + anchor class counts ---------------------
    pro_est = (2 * n_pad * d_pad * mm_bytes + 2 * a_pad * d_pad * (mm_bytes + 4)
               + a_pad * n_pad * (mm_bytes + 4) + 4 * a_pad * 128)
    vmem_spec = pl.BlockSpec(memory_space=pltpu.MemorySpace.VMEM)
    a_centers, counts_a = pl.pallas_call(
        functools.partial(_anchor_kernel, mm_dtype=mm_dtype),
        out_shape=(jax.ShapeDtypeStruct((a_pad, d_pad), mm_dtype),
                   jax.ShapeDtypeStruct((a_pad, 1), jnp.float32)),
        in_specs=[vmem_spec] * 3,
        out_specs=(vmem_spec, vmem_spec),
        compiler_params=_compiler_params(pro_est, cap),
    )(x_mm, ta, trow)

    # Per-anchor weight: valid / (negative count * num_anchors). Tiny metadata;
    # clamping neg_count keeps the degenerate single-class batch finite.
    neg_cnt = jnp.maximum(float(n) - counts_a, 1.0)
    w_a = avalid / (neg_cnt * float(num_anchors))

    # ---- main kernel: parallel grid over row blocks -------------------------
    kernel = functools.partial(
        _dcs_block_kernel,
        margin1=float(margin1), margin2=float(margin2),
        ones_col=ones_col, mm_dtype=mm_dtype)

    flops = (2.0 * n_pad * n_pad * d_pad          # centers matmul
             + 2.0 * a_pad * n_pad * d_pad        # gram over all blocks
             + 2.0 * 8 * n_pad * d_pad)           # squared-norm row matmul
    bytes_accessed = (n_pad * d_pad * (4 + mm_bytes) + a_pad * d_pad * mm_bytes
                      + 3 * n_pad * 4 + num_blocks * 8 * 128 * 4)
    cost = pl.CostEstimate(flops=int(flops),
                           transcendentals=int(n_pad + a_pad * n_pad),
                           bytes_accessed=int(bytes_accessed))

    partials = pl.pallas_call(
        kernel,
        out_shape=jax.ShapeDtypeStruct((num_blocks, 8, 128), jnp.float32),
        grid=(num_blocks,),
        in_specs=[
            pl.BlockSpec((n_pad, d_pad), lambda i: (0, 0)),   # x (matmul dtype), resident
            pl.BlockSpec((tm, d_pad), lambda i: (i, 0)),      # x (f32) row block
            pl.BlockSpec((tm, 1), lambda i: (i, 0)),          # targets, row block
            pl.BlockSpec((1, n_pad), lambda i: (0, 0)),       # targets, full row
            pl.BlockSpec((1, tm), lambda i: (0, i)),          # targets, column block
            pl.BlockSpec((a_pad, 1), lambda i: (0, 0)),       # anchor targets
            pl.BlockSpec((a_pad, d_pad), lambda i: (0, 0)),   # anchor centers
            pl.BlockSpec((a_pad, 1), lambda i: (0, 0)),       # anchor weights
        ],
        out_specs=pl.BlockSpec((None, 8, 128), lambda i: (i, 0, 0)),
        compiler_params=_compiler_params(est, cap, semantics=("parallel",)),
        cost_estimate=cost,
    )(x_mm, x, tcol, trow, trow, ta, a_centers, w_a)

    dist_pc_mean = jnp.sum(partials[:, 0, 0]) / float(n)
    dist_an_mean = jnp.sum(partials[:, 0, 1])
    loss = dist_pc_mean + dist_an_mean
    return loss, dist_pc_mean, dist_an_mean


def dcs_loss_ref(inputs, targets, k_size, margin1=0.0, margin2=0.7):
    """Pure-JAX reference mirroring the PyTorch forward exactly (f32)."""
    inputs = inputs.astype(jnp.float32)
    hi = lax.Precision.HIGHEST
    same = (targets[:, None] == targets[None, :]).astype(jnp.float32)
    centers = jnp.dot(same, inputs, precision=hi) / jnp.sum(same, axis=1, keepdims=True)
    dist_pc = jnp.sqrt(jnp.sum((inputs - centers) ** 2, axis=1))
    dist_pc = jnp.maximum(dist_pc - margin1, 0.0)
    sq = jnp.sum(centers ** 2, axis=1)
    d2 = sq[:, None] + sq[None, :] - 2.0 * jnp.dot(centers, centers.T, precision=hi)
    dist = jnp.sqrt(jnp.maximum(d2, 1e-12))
    neg = 1.0 - same
    hinge = jnp.maximum(margin2 - dist, 0.0) * neg
    row_mean = jnp.sum(hinge, axis=1) / jnp.sum(neg, axis=1)
    dist_an = row_mean[::k_size]
    return jnp.mean(dist_pc) + jnp.mean(dist_an), jnp.mean(dist_pc), jnp.mean(dist_an)


if __name__ == "__main__":
    key = jax.random.PRNGKey(0)
    ka, kb, kc = jax.random.split(key, 3)

    # config 1: 16 identities x 4 samples, d=128 (d % 128 == 0 -> reduce fallback).
    n, d, k_size = 64, 128, 4
    inputs = 0.05 * jax.random.normal(ka, (n, d), dtype=jnp.float32)
    targets = jnp.repeat(jnp.arange(n // k_size, dtype=jnp.int32), k_size)
    ref = dcs_loss_ref(inputs, targets, k_size)

    out_f32 = dcs_loss(inputs, targets, k_size, matmul_dtype=jnp.float32)
    jax.block_until_ready(out_f32[0])
    for a, b in zip(out_f32, ref):
        assert jnp.allclose(a, b, rtol=1e-3, atol=1e-3), (a, b)

    out_bf16 = dcs_loss(inputs, targets, k_size)          # default bf16 MXU path
    jax.block_until_ready(out_bf16[0])
    for a, b in zip(out_bf16, ref):
        assert jnp.allclose(a, b, rtol=3e-2, atol=3e-2), (a, b)

    # config 2: unaligned shapes -> padding + ones-column counts fold.
    n2, d2, ks2 = 24, 48, 3
    inputs2 = 0.05 * jax.random.normal(kb, (n2, d2), dtype=jnp.float32)
    targets2 = jnp.repeat(jnp.arange(n2 // ks2, dtype=jnp.int32), ks2)
    ref2 = dcs_loss_ref(inputs2, targets2, ks2)
    out2 = dcs_loss(inputs2, targets2, ks2, matmul_dtype=jnp.float32)
    jax.block_until_ready(out2[0])
    for a, b in zip(out2, ref2):
        assert jnp.allclose(a, b, rtol=1e-3, atol=1e-3), (a, b)
    out2b = dcs_loss(inputs2, targets2, ks2)               # bf16 + counts fold
    jax.block_until_ready(out2b[0])
    for a, b in zip(out2b, ref2):
        assert jnp.allclose(a, b, rtol=3e-2, atol=3e-2), (a, b)

    # config 3: multi-block parallel grid (block_rows=128 -> 2 row blocks).
    n3, d3, ks3 = 256, 64, 4
    inputs3 = 0.05 * jax.random.normal(kc, (n3, d3), dtype=jnp.float32)
    targets3 = jnp.repeat(jnp.arange(n3 // ks3, dtype=jnp.int32), ks3)
    ref3 = dcs_loss_ref(inputs3, targets3, ks3)
    out3 = dcs_loss(inputs3, targets3, ks3, matmul_dtype=jnp.float32, block_rows=128)
    jax.block_until_ready(out3[0])
    for a, b in zip(out3, ref3):
        assert jnp.allclose(a, b, rtol=1e-3, atol=1e-3), (a, b)
    out3b = dcs_loss(inputs3, targets3, ks3, block_rows=128)   # bf16, multi-block
    jax.block_until_ready(out3b[0])
    for a, b in zip(out3b, ref3):
        assert jnp.allclose(a, b, rtol=3e-2, atol=3e-2), (a, b)

    print("KERNEL_OK")
</pallas_src>

<mosaic_0001>
module attributes {stable_mosaic.version = 11 : i64} {
  func.func @_anchor_kernel(%arg0: memref<128x128xf32, #tpu.memory_space<vmem>>, %arg1: memref<16x1xi32, #tpu.memory_space<vmem>>, %arg2: memref<1x128xi32, #tpu.memory_space<vmem>>, %arg3: memref<16x128xf32, #tpu.memory_space<vmem>>, %arg4: memref<16x1xf32, #tpu.memory_space<vmem>>) attributes {dimension_semantics = [], scalar_prefetch = 0 : i64, scratch_operands = 0 : i64, tpu.core_type = #tpu.core_type<tc>} {
    %c0 = arith.constant 0 : index
    %c0_0 = arith.constant 0 : index
    %0 = vector.load %arg1[%c0, %c0_0] : memref<16x1xi32, #tpu.memory_space<vmem>>, vector<16x1xi32>
    %c0_1 = arith.constant 0 : index
    %c0_2 = arith.constant 0 : index
    %1 = vector.load %arg2[%c0_1, %c0_2] : memref<1x128xi32, #tpu.memory_space<vmem>>, vector<1x128xi32>
    %2 = vector.broadcast %0 : vector<16x1xi32> to vector<16x128xi32>
    %3 = vector.broadcast %1 : vector<1x128xi32> to vector<16x128xi32>
    %4 = arith.cmpi eq, %2, %3 : vector<16x128xi32>
    %c0_i32 = arith.constant 0 : i32
    %5 = vector.broadcast %c0_i32 : i32 to vector<1x128xi32>
    %6 = arith.cmpi sge, %1, %5 : vector<1x128xi32>
    %7 = vector.broadcast %6 : vector<1x128xi1> to vector<16x128xi1>
    %8 = arith.andi %4, %7 : vector<16x128xi1>
    %cst = arith.constant 1.000000e+00 : f32
    %cst_3 = arith.constant 0.000000e+00 : f32
    %9 = vector.broadcast %cst : f32 to vector<16x128xf32>
    %10 = vector.broadcast %cst_3 : f32 to vector<16x128xf32>
    %11 = arith.select %8, %9, %10 : vector<16x128xi1>, vector<16x128xf32>
    %cst_4 = arith.constant 1.000000e+00 : f32
    %cst_5 = arith.constant 0.000000e+00 : f32
    %12 = vector.broadcast %cst_4 : f32 to vector<16x128xf32>
    %13 = vector.broadcast %cst_5 : f32 to vector<16x128xf32>
    %14 = arith.select %8, %12, %13 : vector<16x128xi1>, vector<16x128xf32>
    %cst_6 = arith.constant dense<0.000000e+00> : vector<16xf32>
    %15 = vector.multi_reduction <add>, %14, %cst_6 [1] : vector<16x128xf32> to vector<16xf32>
    %16 = vector.shape_cast %15 : vector<16xf32> to vector<16x1xf32>
    %c0_7 = arith.constant 0 : index
    %c0_8 = arith.constant 0 : index
    %17 = vector.load %arg0[%c0_7, %c0_8] : memref<128x128xf32, #tpu.memory_space<vmem>>, vector<128x128xf32>
    %cst_9 = arith.constant dense<0.000000e+00> : vector<16x128xf32>
    %18 = tpu.matmul %11, %17, %cst_9 {dimension_numbers = #tpu.dot_dimension_numbers<[1], [0], [0], [1], [0, 0, 1, 1], [], []>} : vector<16x128xf32>, vector<128x128xf32>, vector<16x128xf32> -> vector<16x128xf32>
    %cst_10 = arith.constant 1.000000e+00 : f32
    %19 = vector.broadcast %cst_10 : f32 to vector<16x1xf32>
    %20 = arith.maximumf %16, %19 : vector<16x1xf32>
    %cst_11 = arith.constant 1.000000e+00 : f32
    %21 = vector.broadcast %cst_11 : f32 to vector<16x1xf32>
    %22 = arith.divf %21, %20 : vector<16x1xf32>
    %23 = vector.broadcast %22 : vector<16x1xf32> to vector<16x128xf32>
    %24 = arith.mulf %18, %23 : vector<16x128xf32>
    %c0_12 = arith.constant 0 : index
    %c0_13 = arith.constant 0 : index
    %25 = vector.load %arg3[%c0_12, %c0_13] : memref<16x128xf32, #tpu.memory_space<vmem>>, vector<16x128xf32>
    tpu.vector_store %arg3[%c0_12, %c0_13], %24 {strides = array<i32>} : memref<16x128xf32, #tpu.memory_space<vmem>>, vector<16x128xf32>,
    %c0_14 = arith.constant 0 : index
    %c0_15 = arith.constant 0 : index
    %26 = vector.load %arg4[%c0_14, %c0_15] : memref<16x1xf32, #tpu.memory_space<vmem>>, vector<16x1xf32>
    tpu.vector_store %arg4[%c0_14, %c0_15], %16 {strides = array<i32>} : memref<16x1xf32, #tpu.memory_space<vmem>>, vector<16x1xf32>,
    return
  }
}

</mosaic_0001>

<llo_original>
// kernel: tpu_custom_call.1
$region0: #{tpu_custom_call.1}
  #allocation0 [shape = 'u32[]', space=smem, size = 0x4, offset = 0x4, fixed_abs, tag = 'smem constant byte address 0x4 - core index']
  #allocation1 [shape = 'u32[72,128]{1,0:T(1,128)}', space=vmem, size = 0x9000, scoped, tag = 'internal scratch']
  %s0 = inlined_call_operand.hbm [shape: f32[128,128], index: 0, kind: input, shape index: {}]
  %s1 = inlined_call_operand.vmem [shape: s32[16,1], index: 1, kind: input, shape index: {}]
  %s2 = inlined_call_operand.vmem [shape: s32[1,128], index: 2, kind: input, shape index: {}]
  %s3 = inlined_call_operand.hbm [shape: f32[16,128], index: 3, kind: output, shape index: {0}]
  %s4 = inlined_call_operand.vmem [shape: f32[16,1], index: 4, kind: output, shape index: {1}]
  %5 = xla_tuple %s3, %s4
  %s6 = sld [smem:[#allocation0]]
  $region34: #{tpu_custom_call.1} parent=0
    _
  %s8 = ssub.s32 1, %s6
  %s9 = scalar_select 0, %s8, %s6
  $region1: #{tpu_custom_call.1} parent=0
    #allocation2 [shape = 'u8[65536]{0}', space=vmem, size = 0x10000, scoped, tag = 'input window, operand 0, single buffered']
    #allocation3 [shape = 's32[1]{0}', space=sflag, size = 0x4, scoped, tag = 'scoped memory for tpu_custom_call.1']
    #allocation4 [shape = 's32[1]{0}', space=sflag, size = 0x4, scoped, tag = 'scoped memory for tpu_custom_call.1']
    #allocation5 [shape = 'u8[8192]{0}', space=vmem, size = 0x2000, scoped, tag = 'output window, operand 0, single buffered']
    %10 = vsyncpa [#allocation3], 0
    %11 = vsyncpa [#allocation4], 0
    // Predicated region
    $region2: #{tpu_custom_call.1} parent=1 // pred_check
      _
    $region3: #{tpu_custom_call.1} parent=1 // pred_check_branch
      %13 = sbr.rel (0) target = $region5
    $region4: #{tpu_custom_call.1} parent=1 // pred_region
      %15 = vsyncadd [#allocation3], 0
      %s16 = sshll.u32 %s0, 4
      %s17 = int_to_ptr.hbm [resolvable:$true] %s16
      %s18 = sshll.u32 [#allocation2], 4
      %s19 = int_to_ptr.vmem [resolvable:$true] %s18
      %24 = dma.hbm_to_vmem [thread:$0]  %s17, 2048, %s19, [#allocation3], 128, 128, 8
    $region5: #{tpu_custom_call.1} parent=1 // pred_fallthru
      _
    // Predicated region
    $region6: #{tpu_custom_call.1} parent=1 // pred_check
      _
    $region7: #{tpu_custom_call.1} parent=1 // pred_check_branch
      %26 = sbr.rel (0) target = $region9
    $region8: #{tpu_custom_call.1} parent=1 // pred_region
      _
    $region9: #{tpu_custom_call.1} parent=1 // pred_fallthru
      _
    // Predicated region
    $region10: #{tpu_custom_call.1} parent=1 // pred_check
      _
    $region11: #{tpu_custom_call.1} parent=1 // pred_check_branch
      %28 = sbr.rel (0) target = $region13
    $region12: #{tpu_custom_call.1} parent=1 // pred_region
      _
    $region13: #{tpu_custom_call.1} parent=1 // pred_fallthru
      _
    // Predicated region
    $region14: #{tpu_custom_call.1} parent=1 // pred_check
      _
    $region15: #{tpu_custom_call.1} parent=1 // pred_check_branch
      %30 = sbr.rel (0) target = $region17
    $region16: #{tpu_custom_call.1} parent=1 // pred_region
      %32 = dma.done [#allocation3], 2048
    $region17: #{tpu_custom_call.1} parent=1 // pred_fallthru
      _
    %v33 = vld [vmem:[%s1] sm:$0xff]
    %v34 = vld [vmem:[%s1 + $0x8] sm:$0xff]
    %v35 = vld [vmem:[%s2] sm:$0x1]
    %36 = vset.pattern.permute.xlu0 0
    %37 = vperm.xlu0 %36, %v33
    %v38 = vpop.permute.xlu0 %37
    %39 = vset.pattern.permute.xlu0 0
    %40 = vperm.xlu0 %39, %v34
    %v41 = vpop.permute.xlu0 %40
    %v42 = vperm.slane %v35, 0
    %vm43 = vcmp.eq.s32.totalorder %v38, %v42
    %vm44 = vcmp.eq.s32.totalorder %v41, %v42
    %vm45 = vcmp.ge.s32.totalorder %v35, 0
    %v46 = vsel %vm45, 1, 0
    %v47 = vperm.slane %v46, 0
    %vm48 = vcmp.eq.s32.totalorder %v47, 1
    %vm49 = vmand %vm43, %vm48
    %vm50 = vmand %vm44, %vm48
    %v51 = vsel %vm49, 1.0, 0.0
    %v52 = vsel %vm50, 1.0, 0.0
    %53 = vadd.xlane.f32.xlu0 %v51
    %v54 = vpop.xlane.xlu0 %53
    %55 = vadd.xlane.f32.xlu0 %v52
    %v56 = vpop.xlane.xlu0 %55
    %v57 = vld [vmem:[#allocation2] sm:$0xff]
    %v58 = vld [vmem:[#allocation2 + $0x8] sm:$0xff]
    %v59 = vld [vmem:[#allocation2 + $0x10] sm:$0xff]
    %v60 = vld [vmem:[#allocation2 + $0x18] sm:$0xff]
    %v61 = vld [vmem:[#allocation2 + $0x20] sm:$0xff]
    %v62 = vld [vmem:[#allocation2 + $0x28] sm:$0xff]
    %v63 = vld [vmem:[#allocation2 + $0x30] sm:$0xff]
    %v64 = vld [vmem:[#allocation2 + $0x38] sm:$0xff]
    %v65 = vld [vmem:[#allocation2 + $0x40] sm:$0xff]
    %v66 = vld [vmem:[#allocation2 + $0x48] sm:$0xff]
    %v67 = vld [vmem:[#allocation2 + $0x50] sm:$0xff]
    %v68 = vld [vmem:[#allocation2 + $0x58] sm:$0xff]
    %v69 = vld [vmem:[#allocation2 + $0x60] sm:$0xff]
    %v70 = vld [vmem:[#allocation2 + $0x68] sm:$0xff]
    %v71 = vld [vmem:[#allocation2 + $0x70] sm:$0xff]
    %v72 = vld [vmem:[#allocation2 + $0x78] sm:$0xff]
    %73 = vmatpush.msra.mxu0 %v72
    %74 = vmatpush.msra.mxu0 %v71
    %75 = vmatpush.msra.mxu0 %v70
    %76 = vmatpush.msra.mxu0 %v69
    %77 = vmatpush.msra.mxu0 %v68
    %78 = vmatpush.msra.mxu0 %v67
    %79 = vmatpush.msra.mxu0 %v66
    %80 = vmatpush.msra.mxu0 %v65
    %81 = vmatpush.msra.mxu0 %v64
    %82 = vmatpush.msra.mxu0 %v63
    %83 = vmatpush.msra.mxu0 %v62
    %84 = vmatpush.msra.mxu0 %v61
    %85 = vmatpush.msra.mxu0 %v60
    %86 = vmatpush.msra.mxu0 %v59
    %87 = vmatpush.msra.mxu0 %v58
    %88 = vmatpush.msra.mxu0 %v57
    %89 = vmatmul.f32.gmra.mxu0 %v51
    %v90 = vpop.f32.mrf.mxu0
    %v91 = vadd.f32 0.0, %v90
    %92 = vmatmul.f32.gmra.mxu0 %v52
    %v93 = vpop.f32.mrf.mxu0
    %v94 = vadd.f32 0.0, %v93
    %95 = vdwg.mxu0
    %v96 = vmax.f32 %v54, 1.0
    %v97 = vmax.f32 %v56, 1.0
    %v98 = vrcp.pop %v96
    %v99 = vmul.f32 %v96, %v98
    %v100 = vsub.f32 1.0, %v99
    %v101 = vmul.f32 %v98, %v100
    %v102 = vadd.f32 %v98, %v101
    %vm103 = vweird.f32 %v96
    %vm104 = vweird.f32 %v98
    %vm105 = vmor %vm103, %vm104
    %v106 = vsel %vm105, %v98, %v102
    %v107 = vand.u32 2147483647, %v96
    %vm108 = vcmp.eq.f32.partialorder %v107, 8.507059e+37
    %v109 = vand.u32 %v96, 2147483648
    %v110 = vor.u32 1.1754944e-38, %v109
    %v111 = vsel %vm108, %v110, %v106
    %v112 = vmul.f32 1.0, %v111
    %v113 = vrcp.pop %v97
    %v114 = vmul.f32 %v97, %v113
    %v115 = vsub.f32 1.0, %v114
    %v116 = vmul.f32 %v113, %v115
    %v117 = vadd.f32 %v113, %v116
    %vm118 = vweird.f32 %v97
    %vm119 = vweird.f32 %v113
    %vm120 = vmor %vm118, %vm119
    %v121 = vsel %vm120, %v113, %v117
    %v122 = vand.u32 2147483647, %v97
    %vm123 = vcmp.eq.f32.partialorder %v122, 8.507059e+37
    %v124 = vand.u32 %v97, 2147483648
    %v125 = vor.u32 1.1754944e-38, %v124
    %v126 = vsel %vm123, %v125, %v121
    %v127 = vmul.f32 1.0, %v126
    %v128 = vmul.f32 %v91, %v112
    %v129 = vmul.f32 %v94, %v127
    %130 = vst [vmem:[#allocation5] sm:$0xff] %v128
    %131 = vst [vmem:[#allocation5 + $0x8] sm:$0xff] %v129
    %vm132 = vcmask 7168
    %133 = vst.msk [vmem:[%s4] sm:$0xff] %vm132, %v54
    %134 = vst.msk [vmem:[%s4 + $0x8] sm:$0xff] %vm132, %v56
    // Predicated region
    $region18: #{tpu_custom_call.1} parent=1 // pred_check
      _
    $region19: #{tpu_custom_call.1} parent=1 // pred_check_branch
      %136 = sbr.rel (0) target = $region21
    $region20: #{tpu_custom_call.1} parent=1 // pred_region
      %138 = vsyncadd [#allocation4], 0
      %s139 = sshll.u32 [#allocation5], 4
      %s140 = int_to_ptr.vmem [resolvable:$true] %s139
      %s141 = sshll.u32 %s3, 4
      %s142 = int_to_ptr.hbm [resolvable:$true] %s141
      %147 = dma.vmem_to_hbm [thread:$0]  %s140, 256, %s142, [#allocation4], 128, 128, 8
    $region21: #{tpu_custom_call.1} parent=1 // pred_fallthru
      _
    // Predicated region
    $region22: #{tpu_custom_call.1} parent=1 // pred_check
      _
    $region23: #{tpu_custom_call.1} parent=1 // pred_check_branch
      %149 = sbr.rel (0) target = $region25
    $region24: #{tpu_custom_call.1} parent=1 // pred_region
      _
    $region25: #{tpu_custom_call.1} parent=1 // pred_fallthru
      _
    // Predicated region
    $region26: #{tpu_custom_call.1} parent=1 // pred_check
      _
    $region27: #{tpu_custom_call.1} parent=1 // pred_check_branch
      %151 = sbr.rel (0) target = $region29
    $region28: #{tpu_custom_call.1} parent=1 // pred_region
      %153 = dma.done [#allocation4], 256
    $region29: #{tpu_custom_call.1} parent=1 // pred_fallthru
      _
    // Predicated region
    $region30: #{tpu_custom_call.1} parent=1 // pred_check
      _
    $region31: #{tpu_custom_call.1} parent=1 // pred_check_branch
      %155 = sbr.rel (0) target = $region33
    $region32: #{tpu_custom_call.1} parent=1 // pred_region
      _
    $region33: #{tpu_custom_call.1} parent=1 // pred_fallthru
      _
    %156 = vsyncpa [#allocation3], 1
    %157 = vsyncpa [#allocation4], 1

</llo_original>
